<compile_context>
chip_gen: v7x
topology: tpu7x:2x2x1
jax: 0.10.0
libtpu: 0.0.40
codegen_flags: <defaults>
</compile_context>

<pallas_src>
import jax
import jax.numpy as jnp
from jax import lax
from jax.experimental import pallas as pl
from jax.experimental.pallas import tpu as pltpu

MAX_C = 10        # matches torch.zeros(b, 10): every context length must be <= 10
MAX_C_PAD = 16    # per-example context window processed by the kernel (padded + masked)
_NEG_INF = -1e30


def _round_up(x, m):
    return (x + m - 1) // m * m


def _cosine_sim_kernel(lens_ref, q_ref, src_simil_ref, sources_ref,
                       picked_ref, sim_ref):
    # Per-grid-step block shapes (TB examples):
    #   lens_ref      (TB, 1, 1)              int32
    #   q_ref         (TB, 1, H)              f32
    #   src_simil_ref (TB, MAX_C_PAD, H)      f32
    #   sources_ref   (TB, MAX_C_PAD, IN_SEQ) f32
    #   picked_ref    (TB, 1, IN_SEQ)         f32
    #   sim_ref       (TB, MAX_C_PAD, 1)      f32
    lens = lens_ref[...]                                     # (TB, 1, 1)

    # scores[t, j] = <src_simil[t, j, :], q[t, :]>  (VPU multiply + lane reduction)
    prod = src_simil_ref[...] * q_ref[...]                   # (TB, C, H)
    scores = jnp.sum(prod, axis=2, keepdims=True)            # (TB, C, 1)

    row = lax.broadcasted_iota(jnp.int32, scores.shape, 1)   # context index j
    valid = row < lens                                       # (TB, C, 1)

    # Masked softmax over the c valid positions (matches F.softmax on length-c vector).
    masked = jnp.where(valid, scores, jnp.full_like(scores, _NEG_INF))
    m = jnp.max(masked, axis=1, keepdims=True)               # (TB, 1, 1)
    p = jnp.where(valid, jnp.exp(masked - m), 0.0)           # (TB, C, 1)
    denom = jnp.sum(p, axis=1, keepdims=True)                # (TB, 1, 1)
    # maximum() guards padded rows (len == 0); real rows are unaffected.
    sim = p / jnp.maximum(denom, 1e-30)                      # zeros outside valid range
    sim_ref[...] = sim.astype(sim_ref.dtype)

    # First-occurrence argmax over valid positions, fully vectorized.
    is_max = jnp.logical_and(masked >= m, valid)
    cand = jnp.where(is_max, row, MAX_C_PAD)
    argmax = jnp.min(cand, axis=1, keepdims=True)            # (TB, 1, 1)

    # Gather sources[argmax] via one-hot select + sublane reduction (no dynamic index).
    one_hot = row == argmax                                  # (TB, C, 1)
    sel = jnp.where(one_hot, sources_ref[...], 0.0)          # (TB, C, IN_SEQ)
    picked = jnp.sum(sel, axis=1, keepdims=True)             # (TB, 1, IN_SEQ)
    picked_ref[...] = picked.astype(picked_ref.dtype)


def cosine_similarity_forward(sources, src_simil, q_simil, context_len, *, tb=128):
    """Pallas implementation of CosineSimilarity.forward.

    sources:     (BC, IN_SEQ) float32
    src_simil:   (BC, H)      float32
    q_simil:     (B, H)       float32
    context_len: (B,) int32, sum == BC, each entry in [1, MAX_C]
    returns (picked_sources (B, IN_SEQ), similarity_tensor (B, 10))
    """
    bc, in_seq = sources.shape
    b, h = q_simil.shape
    context_len = jnp.asarray(context_len, jnp.int32)

    offsets = jnp.concatenate(
        [jnp.zeros((1,), jnp.int32),
         jnp.cumsum(context_len)[:-1].astype(jnp.int32)])

    # Pre-pack ragged contexts into dense (B, MAX_C_PAD, ...) slabs: one XLA gather
    # reading the same bytes the kernel consumes, so BlockSpec can tile & pipeline.
    gidx = jnp.clip(
        offsets[:, None] + jnp.arange(MAX_C_PAD, dtype=jnp.int32)[None, :],
        0, bc - 1)                                            # (B, MAX_C_PAD)
    src_simil_packed = jnp.take(src_simil, gidx, axis=0)      # (B, C, H)
    sources_packed = jnp.take(sources, gidx, axis=0)          # (B, C, IN_SEQ)

    # Batch TB examples per grid step; pad the batch to a multiple of TB.
    tb = min(tb, _round_up(b, 8))
    b_pad = _round_up(b, tb)
    pad = b_pad - b
    src_simil_packed = jnp.pad(src_simil_packed, ((0, pad), (0, 0), (0, 0)))
    sources_packed = jnp.pad(sources_packed, ((0, pad), (0, 0), (0, 0)))
    q3 = jnp.pad(q_simil, ((0, pad), (0, 0)))[:, None, :]     # (b_pad, 1, H)
    lens3 = jnp.pad(context_len, (0, pad))[:, None, None]     # (b_pad, 1, 1)

    cost = pl.CostEstimate(
        flops=int(2 * b_pad * MAX_C_PAD * (h + in_seq)),
        transcendentals=int(b_pad * MAX_C_PAD),
        bytes_accessed=int(4 * (b_pad * MAX_C_PAD * (h + in_seq)
                                + b_pad * (h + 1)
                                + b_pad * (in_seq + MAX_C_PAD))))

    picked3, sim3 = pl.pallas_call(
        _cosine_sim_kernel,
        out_shape=(jax.ShapeDtypeStruct((b_pad, 1, in_seq), sources.dtype),
                   jax.ShapeDtypeStruct((b_pad, MAX_C_PAD, 1), jnp.float32)),
        grid_spec=pltpu.PrefetchScalarGridSpec(
            num_scalar_prefetch=0,
            grid=(b_pad // tb,),
            in_specs=[
                pl.BlockSpec((tb, 1, 1), lambda i: (i, 0, 0)),            # lens
                pl.BlockSpec((tb, 1, h), lambda i: (i, 0, 0)),            # q_simil
                pl.BlockSpec((tb, MAX_C_PAD, h), lambda i: (i, 0, 0)),    # src_simil
                pl.BlockSpec((tb, MAX_C_PAD, in_seq), lambda i: (i, 0, 0)),  # sources
            ],
            out_specs=[
                pl.BlockSpec((tb, 1, in_seq), lambda i: (i, 0, 0)),       # picked
                pl.BlockSpec((tb, MAX_C_PAD, 1), lambda i: (i, 0, 0)),    # similarity
            ],
        ),
        compiler_params=pltpu.CompilerParams(
            dimension_semantics=("parallel",),
            vmem_limit_bytes=32 * 1024 * 1024),
        cost_estimate=cost,
    )(lens3, q3, src_simil_packed, sources_packed)

    picked = picked3.reshape(b_pad, in_seq)[:b]
    sim = sim3.reshape(b_pad, MAX_C_PAD)[:b, :MAX_C]
    return picked, sim


def _reference(sources, src_simil, q_simil, context_len):
    # Pure-JAX replica of the PyTorch loop, for a correctness spot-check.
    b = len(context_len)
    idx = 0
    picks, sims = [], jnp.zeros((b, MAX_C), jnp.float32)
    for i, c in enumerate(context_len):
        s = src_simil[idx:idx + c] @ q_simil[i]
        p = jax.nn.softmax(s)
        picks.append(sources[idx + int(jnp.argmax(p))])
        sims = sims.at[i, :c].set(p)
        idx += c
    return jnp.stack(picks, 0), sims


if __name__ == "__main__":
    key = jax.random.PRNGKey(0)
    k1, k2, k3 = jax.random.split(key, 3)

    context_len = [3, 5, 7, 2]           # b = 4, bc = 17, each length in [1, 10]
    assert all(1 <= c <= MAX_C for c in context_len)
    b = len(context_len)
    bc = sum(context_len)
    in_seq = 8
    hidden = 32

    # sources treated as float data (e.g. token ids cast to float32)
    sources = jnp.floor(jax.random.uniform(k1, (bc, in_seq)) * 100.0).astype(jnp.float32)
    # NOTE: the PyTorch module (despite its name) uses a raw dot product before softmax;
    # no L2 normalization is applied, so none is applied here either.
    src_simil = jax.random.normal(k2, (bc, hidden), jnp.float32)
    q_simil = jax.random.normal(k3, (b, hidden), jnp.float32)

    picked, sim = cosine_similarity_forward(sources, src_simil, q_simil, context_len)
    jax.block_until_ready((picked, sim))

    ref_picked, ref_sim = _reference(sources, src_simil, q_simil, context_len)
    assert picked.shape == (b, in_seq) and sim.shape == (b, MAX_C)
    assert jnp.allclose(picked, ref_picked, atol=1e-5)
    assert jnp.allclose(sim, ref_sim, atol=1e-5)

    print("KERNEL_OK")
</pallas_src>

<mosaic_0001>
module attributes {stable_mosaic.version = 11 : i64} {
  func.func @_cosine_sim_kernel(%arg0: i32, %arg1: memref<8x1x1xi32, #tpu.memory_space<vmem>>, %arg2: memref<8x1x32xf32, #tpu.memory_space<vmem>>, %arg3: memref<8x16x32xf32, #tpu.memory_space<vmem>>, %arg4: memref<8x16x8xf32, #tpu.memory_space<vmem>>, %arg5: memref<8x1x8xf32, #tpu.memory_space<vmem>>, %arg6: memref<8x16x1xf32, #tpu.memory_space<vmem>>) attributes {dimension_semantics = [#tpu.dimension_semantics<parallel>], iteration_bounds = array<i64: 1>, scalar_prefetch = 0 : i64, scratch_operands = 0 : i64, tpu.core_type = #tpu.core_type<tc>, window_params = [{transform_indices = @transform_0, window_bounds = array<i64: 8, 1, 1>}, {transform_indices = @transform_1, window_bounds = array<i64: 8, 1, 32>}, {transform_indices = @transform_2, window_bounds = array<i64: 8, 16, 32>}, {transform_indices = @transform_3, window_bounds = array<i64: 8, 16, 8>}, {transform_indices = @transform_4, window_bounds = array<i64: 8, 1, 8>}, {transform_indices = @transform_5, window_bounds = array<i64: 8, 16, 1>}]} {
    %c0 = arith.constant 0 : index
    %c0_0 = arith.constant 0 : index
    %c0_1 = arith.constant 0 : index
    %0 = vector.load %arg1[%c0, %c0_0, %c0_1] : memref<8x1x1xi32, #tpu.memory_space<vmem>>, vector<8x1x1xi32>
    %c0_2 = arith.constant 0 : index
    %c0_3 = arith.constant 0 : index
    %c0_4 = arith.constant 0 : index
    %1 = vector.load %arg3[%c0_2, %c0_3, %c0_4] : memref<8x16x32xf32, #tpu.memory_space<vmem>>, vector<8x16x32xf32>
    %c0_5 = arith.constant 0 : index
    %c0_6 = arith.constant 0 : index
    %c0_7 = arith.constant 0 : index
    %2 = vector.load %arg2[%c0_5, %c0_6, %c0_7] : memref<8x1x32xf32, #tpu.memory_space<vmem>>, vector<8x1x32xf32>
    %3 = vector.broadcast %2 : vector<8x1x32xf32> to vector<8x16x32xf32>
    %4 = arith.mulf %1, %3 : vector<8x16x32xf32>
    %cst = arith.constant dense<0.000000e+00> : vector<8x16xf32>
    %5 = vector.multi_reduction <add>, %4, %cst [2] : vector<8x16x32xf32> to vector<8x16xf32>
    %6 = vector.shape_cast %5 : vector<8x16xf32> to vector<8x16x1xf32>
    %7 = tpu.iota {dimensions = array<i32: 1>} : vector<8x16x1xi32>
    %8 = vector.broadcast %0 : vector<8x1x1xi32> to vector<8x16x1xi32>
    %9 = arith.cmpi slt, %7, %8 : vector<8x16x1xi32>
    %cst_8 = arith.constant -1.000000e+30 : f32
    %10 = vector.broadcast %cst_8 : f32 to vector<8x16x1xf32>
    %11 = arith.select %9, %6, %10 : vector<8x16x1xi1>, vector<8x16x1xf32>
    %cst_9 = arith.constant dense<0xFF800000> : vector<8x1xf32>
    %12 = vector.multi_reduction <maximumf>, %11, %cst_9 [1] : vector<8x16x1xf32> to vector<8x1xf32>
    %13 = vector.shape_cast %12 : vector<8x1xf32> to vector<8x1x1xf32>
    %14 = vector.broadcast %13 : vector<8x1x1xf32> to vector<8x16x1xf32>
    %15 = arith.subf %11, %14 : vector<8x16x1xf32>
    %16 = math.exp %15 : vector<8x16x1xf32>
    %cst_10 = arith.constant 0.000000e+00 : f32
    %17 = vector.broadcast %cst_10 : f32 to vector<8x16x1xf32>
    %18 = arith.select %9, %16, %17 : vector<8x16x1xi1>, vector<8x16x1xf32>
    %cst_11 = arith.constant dense<0.000000e+00> : vector<8x1xf32>
    %19 = vector.multi_reduction <add>, %18, %cst_11 [1] : vector<8x16x1xf32> to vector<8x1xf32>
    %20 = vector.shape_cast %19 : vector<8x1xf32> to vector<8x1x1xf32>
    %cst_12 = arith.constant 1.000000e-30 : f32
    %21 = vector.broadcast %cst_12 : f32 to vector<8x1x1xf32>
    %22 = arith.maximumf %20, %21 : vector<8x1x1xf32>
    %23 = vector.broadcast %22 : vector<8x1x1xf32> to vector<8x16x1xf32>
    %24 = arith.divf %18, %23 : vector<8x16x1xf32>
    %c0_13 = arith.constant 0 : index
    %c0_14 = arith.constant 0 : index
    %c0_15 = arith.constant 0 : index
    %25 = vector.load %arg6[%c0_13, %c0_14, %c0_15] : memref<8x16x1xf32, #tpu.memory_space<vmem>>, vector<8x16x1xf32>
    tpu.vector_store %arg6[%c0_13, %c0_14, %c0_15], %24 {strides = array<i32>} : memref<8x16x1xf32, #tpu.memory_space<vmem>>, vector<8x16x1xf32>,
    %26 = vector.broadcast %13 : vector<8x1x1xf32> to vector<8x16x1xf32>
    %27 = arith.cmpf oge, %11, %26 : vector<8x16x1xf32>
    %28 = arith.andi %27, %9 : vector<8x16x1xi1>
    %c16_i32 = arith.constant 16 : i32
    %29 = vector.broadcast %c16_i32 : i32 to vector<8x16x1xi32>
    %30 = arith.select %28, %7, %29 : vector<8x16x1xi1>, vector<8x16x1xi32>
    %cst_16 = arith.constant dense<2147483647> : vector<8x1xi32>
    %31 = vector.multi_reduction <minsi>, %30, %cst_16 [1] : vector<8x16x1xi32> to vector<8x1xi32>
    %32 = vector.shape_cast %31 : vector<8x1xi32> to vector<8x1x1xi32>
    %33 = vector.broadcast %32 : vector<8x1x1xi32> to vector<8x16x1xi32>
    %34 = arith.cmpi eq, %7, %33 : vector<8x16x1xi32>
    %c0_17 = arith.constant 0 : index
    %c0_18 = arith.constant 0 : index
    %c0_19 = arith.constant 0 : index
    %35 = vector.load %arg4[%c0_17, %c0_18, %c0_19] : memref<8x16x8xf32, #tpu.memory_space<vmem>>, vector<8x16x8xf32>
    %cst_20 = arith.constant 0.000000e+00 : f32
    %36 = vector.shape_cast %34 : vector<8x16x1xi1> to vector<8x16x1xi1>
    %37 = vector.broadcast %36 : vector<8x16x1xi1> to vector<8x16x8xi1>
    %38 = vector.broadcast %cst_20 : f32 to vector<8x16x8xf32>
    %39 = arith.select %37, %35, %38 : vector<8x16x8xi1>, vector<8x16x8xf32>
    %cst_21 = arith.constant dense<0.000000e+00> : vector<8x8xf32>
    %40 = vector.multi_reduction <add>, %39, %cst_21 [1] : vector<8x16x8xf32> to vector<8x8xf32>
    %41 = vector.shape_cast %40 : vector<8x8xf32> to vector<8x1x8xf32>
    %c0_22 = arith.constant 0 : index
    %c0_23 = arith.constant 0 : index
    %c0_24 = arith.constant 0 : index
    %42 = vector.load %arg5[%c0_22, %c0_23, %c0_24] : memref<8x1x8xf32, #tpu.memory_space<vmem>>, vector<8x1x8xf32>
    tpu.vector_store %arg5[%c0_22, %c0_23, %c0_24], %41 {strides = array<i32>} : memref<8x1x8xf32, #tpu.memory_space<vmem>>, vector<8x1x8xf32>,
    return
  }
  func.func @transform_0(%arg0: i32) -> (i32, i32, i32) {
    %c0_i32 = arith.constant 0 : i32
    %c0_i32_0 = arith.constant 0 : i32
    %c0_i32_1 = arith.constant 0 : i32
    return %arg0, %c0_i32, %c0_i32_0 : i32, i32, i32
  }
  func.func @transform_1(%arg0: i32) -> (i32, i32, i32) {
    %c0_i32 = arith.constant 0 : i32
    %c0_i32_0 = arith.constant 0 : i32
    %c0_i32_1 = arith.constant 0 : i32
    return %arg0, %c0_i32, %c0_i32_0 : i32, i32, i32
  }
  func.func @transform_2(%arg0: i32) -> (i32, i32, i32) {
    %c0_i32 = arith.constant 0 : i32
    %c0_i32_0 = arith.constant 0 : i32
    %c0_i32_1 = arith.constant 0 : i32
    return %arg0, %c0_i32, %c0_i32_0 : i32, i32, i32
  }
  func.func @transform_3(%arg0: i32) -> (i32, i32, i32) {
    %c0_i32 = arith.constant 0 : i32
    %c0_i32_0 = arith.constant 0 : i32
    %c0_i32_1 = arith.constant 0 : i32
    return %arg0, %c0_i32, %c0_i32_0 : i32, i32, i32
  }
  func.func @transform_4(%arg0: i32) -> (i32, i32, i32) {
    %c0_i32 = arith.constant 0 : i32
    %c0_i32_0 = arith.constant 0 : i32
    %c0_i32_1 = arith.constant 0 : i32
    return %arg0, %c0_i32, %c0_i32_0 : i32, i32, i32
  }
  func.func @transform_5(%arg0: i32) -> (i32, i32, i32) {
    %c0_i32 = arith.constant 0 : i32
    %c0_i32_0 = arith.constant 0 : i32
    %c0_i32_1 = arith.constant 0 : i32
    return %arg0, %c0_i32, %c0_i32_0 : i32, i32, i32
  }
}

</mosaic_0001>

<llo_original>
// kernel: tpu_custom_call.1
$region0: #{tpu_custom_call.1}
  #allocation0 [shape = 'u32[]', space=smem, size = 0x4, offset = 0x4, fixed_abs, tag = 'smem constant byte address 0x4 - core index']
  #allocation1 [shape = 'u32[144,128]{1,0:T(1,128)}', space=vmem, size = 0x12000, scoped, tag = 'internal scratch']
  %s0 = inlined_call_operand.vmem [shape: s32[8,1,1], index: 0, kind: input, shape index: {}]
  %s1 = inlined_call_operand.vmem [shape: f32[8,1,32], index: 1, kind: input, shape index: {}]
  %s2 = inlined_call_operand.vmem [shape: f32[8,16,32], index: 2, kind: input, shape index: {}]
  %s3 = inlined_call_operand.vmem [shape: f32[8,16,8], index: 3, kind: input, shape index: {}]
  %s4 = inlined_call_operand.hbm [shape: f32[8,1,8], index: 4, kind: output, shape index: {0}]
  %s5 = inlined_call_operand.vmem [shape: f32[8,16,1], index: 5, kind: output, shape index: {1}]
  %6 = xla_tuple %s4, %s5
  %s7 = sld [smem:[#allocation0]]
  $region34: #{tpu_custom_call.1} parent=0
    _
  %s9 = ssub.s32 1, %s7
  %s10 = scalar_select 0, %s9, %s7
  $region1: #{tpu_custom_call.1} parent=0
    #allocation2 [shape = 'u8[4096]{0}', space=vmem, size = 0x1000, scoped, tag = 'output window, operand 0, single buffered']
    #allocation3 [shape = 's32[1]{0}', space=sflag, size = 0x4, scoped, tag = 'scoped memory for tpu_custom_call.1']
    %11 = vsyncpa [#allocation3], 0
    // Predicated region
    $region2: #{tpu_custom_call.1} parent=1 // pred_check
      _
    $region3: #{tpu_custom_call.1} parent=1 // pred_check_branch
      %13 = sbr.rel (0) target = $region5
    $region4: #{tpu_custom_call.1} parent=1 // pred_region
      _
    $region5: #{tpu_custom_call.1} parent=1 // pred_fallthru
      _
    // Predicated region
    $region6: #{tpu_custom_call.1} parent=1 // pred_check
      _
    $region7: #{tpu_custom_call.1} parent=1 // pred_check_branch
      %15 = sbr.rel (0) target = $region9
    $region8: #{tpu_custom_call.1} parent=1 // pred_region
      _
    $region9: #{tpu_custom_call.1} parent=1 // pred_fallthru
      _
    // Predicated region
    $region10: #{tpu_custom_call.1} parent=1 // pred_check
      _
    $region11: #{tpu_custom_call.1} parent=1 // pred_check_branch
      %17 = sbr.rel (0) target = $region13
    $region12: #{tpu_custom_call.1} parent=1 // pred_region
      _
    $region13: #{tpu_custom_call.1} parent=1 // pred_fallthru
      _
    // Predicated region
    $region14: #{tpu_custom_call.1} parent=1 // pred_check
      _
    $region15: #{tpu_custom_call.1} parent=1 // pred_check_branch
      %19 = sbr.rel (0) target = $region17
    $region16: #{tpu_custom_call.1} parent=1 // pred_region
      _
    $region17: #{tpu_custom_call.1} parent=1 // pred_fallthru
      _
    %v20 = vld [vmem:[%s0] sm:$0x1]
    %v21 = vld [vmem:[%s0 + $0x1] sm:$0x1]
    %v22 = vld [vmem:[%s0 + $0x2] sm:$0x1]
    %v23 = vld [vmem:[%s0 + $0x3] sm:$0x1]
    %v24 = vld [vmem:[%s0 + $0x4] sm:$0x1]
    %v25 = vld [vmem:[%s0 + $0x5] sm:$0x1]
    %v26 = vld [vmem:[%s0 + $0x6] sm:$0x1]
    %v27 = vld [vmem:[%s0 + $0x7] sm:$0x1]
    %v28 = vld [vmem:[%s2] sm:$0xff]
    %v29 = vld [vmem:[%s2 + $0x8] sm:$0xff]
    %v30 = vld [vmem:[%s2 + $0x10] sm:$0xff]
    %v31 = vld [vmem:[%s2 + $0x18] sm:$0xff]
    %v32 = vld [vmem:[%s2 + $0x20] sm:$0xff]
    %v33 = vld [vmem:[%s2 + $0x28] sm:$0xff]
    %v34 = vld [vmem:[%s2 + $0x30] sm:$0xff]
    %v35 = vld [vmem:[%s2 + $0x38] sm:$0xff]
    %v36 = vld [vmem:[%s2 + $0x40] sm:$0xff]
    %v37 = vld [vmem:[%s2 + $0x48] sm:$0xff]
    %v38 = vld [vmem:[%s2 + $0x50] sm:$0xff]
    %v39 = vld [vmem:[%s2 + $0x58] sm:$0xff]
    %v40 = vld [vmem:[%s2 + $0x60] sm:$0xff]
    %v41 = vld [vmem:[%s2 + $0x68] sm:$0xff]
    %v42 = vld [vmem:[%s2 + $0x70] sm:$0xff]
    %v43 = vld [vmem:[%s2 + $0x78] sm:$0xff]
    %v44 = vld [vmem:[%s1] sm:$0x1]
    %v45 = vld [vmem:[%s1 + $0x1] sm:$0x1]
    %v46 = vld [vmem:[%s1 + $0x2] sm:$0x1]
    %v47 = vld [vmem:[%s1 + $0x3] sm:$0x1]
    %v48 = vld [vmem:[%s1 + $0x4] sm:$0x1]
    %v49 = vld [vmem:[%s1 + $0x5] sm:$0x1]
    %v50 = vld [vmem:[%s1 + $0x6] sm:$0x1]
    %v51 = vld [vmem:[%s1 + $0x7] sm:$0x1]
    %v60 = vlaneseq
    %v61 = vshrl.u32 %v60, 7
    %v62 = vsub.s32 0, %v61
    %v63 = vrot.slane %v44, %v62
    %v64 = vlaneseq
    %v65 = vshrl.u32 %v64, 7
    %v66 = vsub.s32 0, %v65
    %v67 = vrot.slane %v45, %v66
    %v68 = vlaneseq
    %v69 = vshrl.u32 %v68, 7
    %v70 = vsub.s32 0, %v69
    %v71 = vrot.slane %v46, %v70
    %v72 = vlaneseq
    %v73 = vshrl.u32 %v72, 7
    %v74 = vsub.s32 0, %v73
    %v75 = vrot.slane %v47, %v74
    %v76 = vlaneseq
    %v77 = vshrl.u32 %v76, 7
    %v78 = vsub.s32 0, %v77
    %v79 = vrot.slane %v48, %v78
    %v80 = vlaneseq
    %v81 = vshrl.u32 %v80, 7
    %v82 = vsub.s32 0, %v81
    %v83 = vrot.slane %v49, %v82
    %v84 = vlaneseq
    %v85 = vshrl.u32 %v84, 7
    %v86 = vsub.s32 0, %v85
    %v87 = vrot.slane %v50, %v86
    %v88 = vlaneseq
    %v89 = vshrl.u32 %v88, 7
    %v90 = vsub.s32 0, %v89
    %v91 = vrot.slane %v51, %v90
    %v100 = vmul.f32 %v28, %v63
    %v101 = vmul.f32 %v29, %v63
    %v102 = vmul.f32 %v30, %v67
    %v103 = vmul.f32 %v31, %v67
    %v104 = vmul.f32 %v32, %v71
    %v105 = vmul.f32 %v33, %v71
    %v106 = vmul.f32 %v34, %v75
    %v107 = vmul.f32 %v35, %v75
    %v108 = vmul.f32 %v36, %v79
    %v109 = vmul.f32 %v37, %v79
    %v110 = vmul.f32 %v38, %v83
    %v111 = vmul.f32 %v39, %v83
    %v112 = vmul.f32 %v40, %v87
    %v113 = vmul.f32 %v41, %v87
    %v114 = vmul.f32 %v42, %v91
    %v115 = vmul.f32 %v43, %v91
    %vm116 = vcmask 261120
    %v117 = vsel %vm116, %v100, 0.0
    %118 = vadd.xlane.f32.xlu0 %v117
    %v119 = vpop.xlane.xlu0 %118
    %v120 = vsel %vm116, %v101, 0.0
    %121 = vadd.xlane.f32.xlu0 %v120
    %v122 = vpop.xlane.xlu0 %121
    %v123 = vsel %vm116, %v102, 0.0
    %124 = vadd.xlane.f32.xlu0 %v123
    %v125 = vpop.xlane.xlu0 %124
    %v126 = vsel %vm116, %v103, 0.0
    %127 = vadd.xlane.f32.xlu0 %v126
    %v128 = vpop.xlane.xlu0 %127
    %v129 = vsel %vm116, %v104, 0.0
    %130 = vadd.xlane.f32.xlu0 %v129
    %v131 = vpop.xlane.xlu0 %130
    %v132 = vsel %vm116, %v105, 0.0
    %133 = vadd.xlane.f32.xlu0 %v132
    %v134 = vpop.xlane.xlu0 %133
    %v135 = vsel %vm116, %v106, 0.0
    %136 = vadd.xlane.f32.xlu0 %v135
    %v137 = vpop.xlane.xlu0 %136
    %v138 = vsel %vm116, %v107, 0.0
    %139 = vadd.xlane.f32.xlu0 %v138
    %v140 = vpop.xlane.xlu0 %139
    %v141 = vsel %vm116, %v108, 0.0
    %142 = vadd.xlane.f32.xlu0 %v141
    %v143 = vpop.xlane.xlu0 %142
    %v144 = vsel %vm116, %v109, 0.0
    %145 = vadd.xlane.f32.xlu0 %v144
    %v146 = vpop.xlane.xlu0 %145
    %v147 = vsel %vm116, %v110, 0.0
    %148 = vadd.xlane.f32.xlu0 %v147
    %v149 = vpop.xlane.xlu0 %148
    %v150 = vsel %vm116, %v111, 0.0
    %151 = vadd.xlane.f32.xlu0 %v150
    %v152 = vpop.xlane.xlu0 %151
    %v153 = vsel %vm116, %v112, 0.0
    %154 = vadd.xlane.f32.xlu0 %v153
    %v155 = vpop.xlane.xlu0 %154
    %v156 = vsel %vm116, %v113, 0.0
    %157 = vadd.xlane.f32.xlu0 %v156
    %v158 = vpop.xlane.xlu0 %157
    %v159 = vsel %vm116, %v114, 0.0
    %160 = vadd.xlane.f32.xlu0 %v159
    %v161 = vpop.xlane.xlu0 %160
    %v162 = vsel %vm116, %v115, 0.0
    %163 = vadd.xlane.f32.xlu0 %v162
    %v164 = vpop.xlane.xlu0 %163
    %v165 = vlaneseq
    %v166 = vshrl.u32 %v165, 7
    %v167 = vadd.s32 %v166, 8
    %v168 = vlaneseq
    %v169 = vshrl.u32 %v168, 7
    %v170 = vsub.s32 0, %v169
    %v171 = vrot.slane %v20, %v170
    %v172 = vlaneseq
    %v173 = vshrl.u32 %v172, 7
    %v174 = vsub.s32 0, %v173
    %v175 = vrot.slane %v21, %v174
    %v176 = vlaneseq
    %v177 = vshrl.u32 %v176, 7
    %v178 = vsub.s32 0, %v177
    %v179 = vrot.slane %v22, %v178
    %v180 = vlaneseq
    %v181 = vshrl.u32 %v180, 7
    %v182 = vsub.s32 0, %v181
    %v183 = vrot.slane %v23, %v182
    %v184 = vlaneseq
    %v185 = vshrl.u32 %v184, 7
    %v186 = vsub.s32 0, %v185
    %v187 = vrot.slane %v24, %v186
    %v188 = vlaneseq
    %v189 = vshrl.u32 %v188, 7
    %v190 = vsub.s32 0, %v189
    %v191 = vrot.slane %v25, %v190
    %v192 = vlaneseq
    %v193 = vshrl.u32 %v192, 7
    %v194 = vsub.s32 0, %v193
    %v195 = vrot.slane %v26, %v194
    %v196 = vlaneseq
    %v197 = vshrl.u32 %v196, 7
    %v198 = vsub.s32 0, %v197
    %v199 = vrot.slane %v27, %v198
    %vm200 = vcmp.lt.s32.totalorder %v166, %v171
    %vm201 = vcmp.lt.s32.totalorder %v167, %v171
    %vm202 = vcmp.lt.s32.totalorder %v166, %v175
    %vm203 = vcmp.lt.s32.totalorder %v167, %v175
    %vm204 = vcmp.lt.s32.totalorder %v166, %v179
    %vm205 = vcmp.lt.s32.totalorder %v167, %v179
    %vm206 = vcmp.lt.s32.totalorder %v166, %v183
    %vm207 = vcmp.lt.s32.totalorder %v167, %v183
    %vm208 = vcmp.lt.s32.totalorder %v166, %v187
    %vm209 = vcmp.lt.s32.totalorder %v167, %v187
    %vm210 = vcmp.lt.s32.totalorder %v166, %v191
    %vm211 = vcmp.lt.s32.totalorder %v167, %v191
    %vm212 = vcmp.lt.s32.totalorder %v166, %v195
    %vm213 = vcmp.lt.s32.totalorder %v167, %v195
    %vm214 = vcmp.lt.s32.totalorder %v166, %v199
    %vm215 = vcmp.lt.s32.totalorder %v167, %v199
    %v216 = vsel %vm200, %v119, -1e+30
    %v217 = vsel %vm201, %v122, -1e+30
    %v218 = vsel %vm202, %v125, -1e+30
    %v219 = vsel %vm203, %v128, -1e+30
    %v220 = vsel %vm204, %v131, -1e+30
    %v221 = vsel %vm205, %v134, -1e+30
    %v222 = vsel %vm206, %v137, -1e+30
    %v223 = vsel %vm207, %v140, -1e+30
    %v224 = vsel %vm208, %v143, -1e+30
    %v225 = vsel %vm209, %v146, -1e+30
    %v226 = vsel %vm210, %v149, -1e+30
    %v227 = vsel %vm211, %v152, -1e+30
    %v228 = vsel %vm212, %v155, -1e+30
    %v229 = vsel %vm213, %v158, -1e+30
    %v230 = vsel %vm214, %v161, -1e+30
    %v231 = vsel %vm215, %v164, -1e+30
    %vm232 = vcmask 7168
    %v233 = vsel %vm232, %v216, -inf
    %v234 = vsel %vm232, %v217, -inf
    %v235 = vmax.f32 %v233, %v234
    %v236 = vrot.slane %v235, 4
    %v237 = vmax.f32 %v235, %v236
    %v238 = vrot.slane %v237, 2
    %v239 = vmax.f32 %v237, %v238
    %v240 = vrot.slane %v239, 1
    %v241 = vmax.f32 %v239, %v240
    %v242 = vsel %vm232, %v218, -inf
    %v243 = vsel %vm232, %v219, -inf
    %v244 = vmax.f32 %v242, %v243
    %v245 = vrot.slane %v244, 4
    %v246 = vmax.f32 %v244, %v245
    %v247 = vrot.slane %v246, 2
    %v248 = vmax.f32 %v246, %v247
    %v249 = vrot.slane %v248, 1
    %v250 = vmax.f32 %v248, %v249
    %v251 = vsel %vm232, %v220, -inf
    %v252 = vsel %vm232, %v221, -inf
    %v253 = vmax.f32 %v251, %v252
    %v254 = vrot.slane %v253, 4
    %v255 = vmax.f32 %v253, %v254
    %v256 = vrot.slane %v255, 2
    %v257 = vmax.f32 %v255, %v256
    %v258 = vrot.slane %v257, 1
    %v259 = vmax.f32 %v257, %v258
    %v260 = vsel %vm232, %v222, -inf
    %v261 = vsel %vm232, %v223, -inf
    %v262 = vmax.f32 %v260, %v261
    %v263 = vrot.slane %v262, 4
    %v264 = vmax.f32 %v262, %v263
    %v265 = vrot.slane %v264, 2
    %v266 = vmax.f32 %v264, %v265
    %v267 = vrot.slane %v266, 1
    %v268 = vmax.f32 %v266, %v267
    %v269 = vsel %vm232, %v224, -inf
    %v270 = vsel %vm232, %v225, -inf
    %v271 = vmax.f32 %v269, %v270
    %v272 = vrot.slane %v271, 4
    %v273 = vmax.f32 %v271, %v272
    %v274 = vrot.slane %v273, 2
    %v275 = vmax.f32 %v273, %v274
    %v276 = vrot.slane %v275, 1
    %v277 = vmax.f32 %v275, %v276
    %v278 = vsel %vm232, %v226, -inf
    %v279 = vsel %vm232, %v227, -inf
    %v280 = vmax.f32 %v278, %v279
    %v281 = vrot.slane %v280, 4
    %v282 = vmax.f32 %v280, %v281
    %v283 = vrot.slane %v282, 2
    %v284 = vmax.f32 %v282, %v283
    %v285 = vrot.slane %v284, 1
    %v286 = vmax.f32 %v284, %v285
    %v287 = vsel %vm232, %v228, -inf
    %v288 = vsel %vm232, %v229, -inf
    %v289 = vmax.f32 %v287, %v288
    %v290 = vrot.slane %v289, 4
    %v291 = vmax.f32 %v289, %v290
    %v292 = vrot.slane %v291, 2
    %v293 = vmax.f32 %v291, %v292
    %v294 = vrot.slane %v293, 1
    %v295 = vmax.f32 %v293, %v294
    %v296 = vsel %vm232, %v230, -inf
    %v297 = vsel %vm232, %v231, -inf
    %v298 = vmax.f32 %v296, %v297
    %v299 = vrot.slane %v298, 4
    %v300 = vmax.f32 %v298, %v299
    %v301 = vrot.slane %v300, 2
    %v302 = vmax.f32 %v300, %v301
    %v303 = vrot.slane %v302, 1
    %v304 = vmax.f32 %v302, %v303
    %v305 = vsub.f32 %v216, %v241
    %v306 = vsub.f32 %v217, %v241
    %v307 = vsub.f32 %v218, %v250
    %v308 = vsub.f32 %v219, %v250
    %v309 = vsub.f32 %v220, %v259
    %v310 = vsub.f32 %v221, %v259
    %v311 = vsub.f32 %v222, %v268
    %v312 = vsub.f32 %v223, %v268
    %v313 = vsub.f32 %v224, %v277
    %v314 = vsub.f32 %v225, %v277
    %v315 = vsub.f32 %v226, %v286
    %v316 = vsub.f32 %v227, %v286
    %v317 = vsub.f32 %v228, %v295
    %v318 = vsub.f32 %v229, %v295
    %v319 = vsub.f32 %v230, %v304
    %v320 = vsub.f32 %v231, %v304
    %v321 = vmul.f32 %v305, 1.442695
    %v322 = vpow.pop %v321
    %v323 = vmul.f32 %v306, 1.442695
    %v324 = vpow.pop %v323
    %v325 = vmul.f32 %v307, 1.442695
    %v326 = vpow.pop %v325
    %v327 = vmul.f32 %v308, 1.442695
    %v328 = vpow.pop %v327
    %v329 = vmul.f32 %v309, 1.442695
    %v330 = vpow.pop %v329
    %v331 = vmul.f32 %v310, 1.442695
    %v332 = vpow.pop %v331
    %v333 = vmul.f32 %v311, 1.442695
    %v334 = vpow.pop %v333
    %v335 = vmul.f32 %v312, 1.442695
    %v336 = vpow.pop %v335
    %v337 = vmul.f32 %v313, 1.442695
    %v338 = vpow.pop %v337
    %v339 = vmul.f32 %v314, 1.442695
    %v340 = vpow.pop %v339
    %v341 = vmul.f32 %v315, 1.442695
    %v342 = vpow.pop %v341
    %v343 = vmul.f32 %v316, 1.442695
    %v344 = vpow.pop %v343
    %v345 = vmul.f32 %v317, 1.442695
    %v346 = vpow.pop %v345
    %v347 = vmul.f32 %v318, 1.442695
    %v348 = vpow.pop %v347
    %v349 = vmul.f32 %v319, 1.442695
    %v350 = vpow.pop %v349
    %v351 = vmul.f32 %v320, 1.442695
    %v352 = vpow.pop %v351
    %v353 = vsel %vm200, %v322, 0.0
    %v354 = vsel %vm201, %v324, 0.0
    %v355 = vsel %vm202, %v326, 0.0
    %v356 = vsel %vm203, %v328, 0.0
    %v357 = vsel %vm204, %v330, 0.0
    %v358 = vsel %vm205, %v332, 0.0
    %v359 = vsel %vm206, %v334, 0.0
    %v360 = vsel %vm207, %v336, 0.0
    %v361 = vsel %vm208, %v338, 0.0
    %v362 = vsel %vm209, %v340, 0.0
    %v363 = vsel %vm210, %v342, 0.0
    %v364 = vsel %vm211, %v344, 0.0
    %v365 = vsel %vm212, %v346, 0.0
    %v366 = vsel %vm213, %v348, 0.0
    %v367 = vsel %vm214, %v350, 0.0
    %v368 = vsel %vm215, %v352, 0.0
    %v369 = vsel %vm232, %v353, 0.0
    %v370 = vsel %vm232, %v354, 0.0
    %v371 = vadd.f32 %v369, %v370
    %v372 = vrot.slane %v371, 4
    %v373 = vadd.f32 %v371, %v372
    %v374 = vrot.slane %v373, 2
    %v375 = vadd.f32 %v373, %v374
    %v376 = vrot.slane %v375, 1
    %v377 = vadd.f32 %v375, %v376
    %v378 = vsel %vm232, %v355, 0.0
    %v379 = vsel %vm232, %v356, 0.0
    %v380 = vadd.f32 %v378, %v379
    %v381 = vrot.slane %v380, 4
    %v382 = vadd.f32 %v380, %v381
    %v383 = vrot.slane %v382, 2
    %v384 = vadd.f32 %v382, %v383
    %v385 = vrot.slane %v384, 1
    %v386 = vadd.f32 %v384, %v385
    %v387 = vsel %vm232, %v357, 0.0
    %v388 = vsel %vm232, %v358, 0.0
    %v389 = vadd.f32 %v387, %v388
    %v390 = vrot.slane %v389, 4
    %v391 = vadd.f32 %v389, %v390
    %v392 = vrot.slane %v391, 2
    %v393 = vadd.f32 %v391, %v392
    %v394 = vrot.slane %v393, 1
    %v395 = vadd.f32 %v393, %v394
    %v396 = vsel %vm232, %v359, 0.0
    %v397 = vsel %vm232, %v360, 0.0
    %v398 = vadd.f32 %v396, %v397
    %v399 = vrot.slane %v398, 4
    %v400 = vadd.f32 %v398, %v399
    %v401 = vrot.slane %v400, 2
    %v402 = vadd.f32 %v400, %v401
    %v403 = vrot.slane %v402, 1
    %v404 = vadd.f32 %v402, %v403
    %v405 = vsel %vm232, %v361, 0.0
    %v406 = vsel %vm232, %v362, 0.0
    %v407 = vadd.f32 %v405, %v406
    %v408 = vrot.slane %v407, 4
    %v409 = vadd.f32 %v407, %v408
    %v410 = vrot.slane %v409, 2
    %v411 = vadd.f32 %v409, %v410
    %v412 = vrot.slane %v411, 1
    %v413 = vadd.f32 %v411, %v412
    %v414 = vsel %vm232, %v363, 0.0
    %v415 = vsel %vm232, %v364, 0.0
    %v416 = vadd.f32 %v414, %v415
    %v417 = vrot.slane %v416, 4
    %v418 = vadd.f32 %v416, %v417
    %v419 = vrot.slane %v418, 2
    %v420 = vadd.f32 %v418, %v419
    %v421 = vrot.slane %v420, 1
    %v422 = vadd.f32 %v420, %v421
    %v423 = vsel %vm232, %v365, 0.0
    %v424 = vsel %vm232, %v366, 0.0
    %v425 = vadd.f32 %v423, %v424
    %v426 = vrot.slane %v425, 4
    %v427 = vadd.f32 %v425, %v426
    %v428 = vrot.slane %v427, 2
    %v429 = vadd.f32 %v427, %v428
    %v430 = vrot.slane %v429, 1
    %v431 = vadd.f32 %v429, %v430
    %v432 = vsel %vm232, %v367, 0.0
    %v433 = vsel %vm232, %v368, 0.0
    %v434 = vadd.f32 %v432, %v433
    %v435 = vrot.slane %v434, 4
    %v436 = vadd.f32 %v434, %v435
    %v437 = vrot.slane %v436, 2
    %v438 = vadd.f32 %v436, %v437
    %v439 = vrot.slane %v438, 1
    %v440 = vadd.f32 %v438, %v439
    %v441 = vmax.f32 %v377, 1e-30
    %v442 = vmax.f32 %v386, 1e-30
    %v443 = vmax.f32 %v395, 1e-30
    %v444 = vmax.f32 %v404, 1e-30
    %v445 = vmax.f32 %v413, 1e-30
    %v446 = vmax.f32 %v422, 1e-30
    %v447 = vmax.f32 %v431, 1e-30
    %v448 = vmax.f32 %v440, 1e-30
    %v449 = vrcp.pop %v441
    %v450 = vmul.f32 %v353, %v449
    %v451 = vmul.f32 %v354, %v449
    %v452 = vrcp.pop %v442
    %v453 = vmul.f32 %v355, %v452
    %v454 = vmul.f32 %v356, %v452
    %v455 = vrcp.pop %v443
    %v456 = vmul.f32 %v357, %v455
    %v457 = vmul.f32 %v358, %v455
    %v458 = vrcp.pop %v444
    %v459 = vmul.f32 %v359, %v458
    %v460 = vmul.f32 %v360, %v458
    %v461 = vrcp.pop %v445
    %v462 = vmul.f32 %v361, %v461
    %v463 = vmul.f32 %v362, %v461
    %v464 = vrcp.pop %v446
    %v465 = vmul.f32 %v363, %v464
    %v466 = vmul.f32 %v364, %v464
    %v467 = vrcp.pop %v447
    %v468 = vmul.f32 %v365, %v467
    %v469 = vmul.f32 %v366, %v467
    %v470 = vrcp.pop %v448
    %v471 = vmul.f32 %v367, %v470
    %v472 = vmul.f32 %v368, %v470
    %473 = vst.msk [vmem:[%s5] sm:$0xff] %vm232, %v450
    %474 = vst.msk [vmem:[%s5 + $0x8] sm:$0xff] %vm232, %v451
    %475 = vst.msk [vmem:[%s5 + $0x10] sm:$0xff] %vm232, %v453
    %476 = vst.msk [vmem:[%s5 + $0x18] sm:$0xff] %vm232, %v454
    %477 = vst.msk [vmem:[%s5 + $0x20] sm:$0xff] %vm232, %v456
    %478 = vst.msk [vmem:[%s5 + $0x28] sm:$0xff] %vm232, %v457
    %479 = vst.msk [vmem:[%s5 + $0x30] sm:$0xff] %vm232, %v459
    %480 = vst.msk [vmem:[%s5 + $0x38] sm:$0xff] %vm232, %v460
    %481 = vst.msk [vmem:[%s5 + $0x40] sm:$0xff] %vm232, %v462
    %482 = vst.msk [vmem:[%s5 + $0x48] sm:$0xff] %vm232, %v463
    %483 = vst.msk [vmem:[%s5 + $0x50] sm:$0xff] %vm232, %v465
    %484 = vst.msk [vmem:[%s5 + $0x58] sm:$0xff] %vm232, %v466
    %485 = vst.msk [vmem:[%s5 + $0x60] sm:$0xff] %vm232, %v468
    %486 = vst.msk [vmem:[%s5 + $0x68] sm:$0xff] %vm232, %v469
    %487 = vst.msk [vmem:[%s5 + $0x70] sm:$0xff] %vm232, %v471
    %488 = vst.msk [vmem:[%s5 + $0x78] sm:$0xff] %vm232, %v472
    %vm489 = vcmp.ge.f32.partialorder %v216, %v241
    %vm490 = vcmp.ge.f32.partialorder %v217, %v241
    %vm491 = vcmp.ge.f32.partialorder %v218, %v250
    %vm492 = vcmp.ge.f32.partialorder %v219, %v250
    %vm493 = vcmp.ge.f32.partialorder %v220, %v259
    %vm494 = vcmp.ge.f32.partialorder %v221, %v259
    %vm495 = vcmp.ge.f32.partialorder %v222, %v268
    %vm496 = vcmp.ge.f32.partialorder %v223, %v268
    %vm497 = vcmp.ge.f32.partialorder %v224, %v277
    %vm498 = vcmp.ge.f32.partialorder %v225, %v277
    %vm499 = vcmp.ge.f32.partialorder %v226, %v286
    %vm500 = vcmp.ge.f32.partialorder %v227, %v286
    %vm501 = vcmp.ge.f32.partialorder %v228, %v295
    %vm502 = vcmp.ge.f32.partialorder %v229, %v295
    %vm503 = vcmp.ge.f32.partialorder %v230, %v304
    %vm504 = vcmp.ge.f32.partialorder %v231, %v304
    %vm505 = vmand %vm489, %vm200
    %vm506 = vmand %vm490, %vm201
    %vm507 = vmand %vm491, %vm202
    %vm508 = vmand %vm492, %vm203
    %vm509 = vmand %vm493, %vm204
    %vm510 = vmand %vm494, %vm205
    %vm511 = vmand %vm495, %vm206
    %vm512 = vmand %vm496, %vm207
    %vm513 = vmand %vm497, %vm208
    %vm514 = vmand %vm498, %vm209
    %vm515 = vmand %vm499, %vm210
    %vm516 = vmand %vm500, %vm211
    %vm517 = vmand %vm501, %vm212
    %vm518 = vmand %vm502, %vm213
    %vm519 = vmand %vm503, %vm214
    %vm520 = vmand %vm504, %vm215
    %v521 = vsel %vm505, %v166, 16
    %v522 = vsel %vm506, %v167, 16
    %v523 = vsel %vm507, %v166, 16
    %v524 = vsel %vm508, %v167, 16
    %v525 = vsel %vm509, %v166, 16
    %v526 = vsel %vm510, %v167, 16
    %v527 = vsel %vm511, %v166, 16
    %v528 = vsel %vm512, %v167, 16
    %v529 = vsel %vm513, %v166, 16
    %v530 = vsel %vm514, %v167, 16
    %v531 = vsel %vm515, %v166, 16
    %v532 = vsel %vm516, %v167, 16
    %v533 = vsel %vm517, %v166, 16
    %v534 = vsel %vm518, %v167, 16
    %v535 = vsel %vm519, %v166, 16
    %v536 = vsel %vm520, %v167, 16
    %v537 = vsel %vm232, %v521, 2147483647
    %v538 = vsel %vm232, %v522, 2147483647
    %vm539 = vcmp.lt.s32.totalorder %v537, %v538
    %v540 = vsel %vm539, %v537, %v538
    %v541 = vrot.slane %v540, 4
    %vm542 = vcmp.lt.s32.totalorder %v540, %v541
    %v543 = vsel %vm542, %v540, %v541
    %v544 = vrot.slane %v543, 2
    %vm545 = vcmp.lt.s32.totalorder %v543, %v544
    %v546 = vsel %vm545, %v543, %v544
    %v547 = vrot.slane %v546, 1
    %vm548 = vcmp.lt.s32.totalorder %v546, %v547
    %v549 = vsel %vm548, %v546, %v547
    %v550 = vsel %vm232, %v523, 2147483647
    %v551 = vsel %vm232, %v524, 2147483647
    %vm552 = vcmp.lt.s32.totalorder %v550, %v551
    %v553 = vsel %vm552, %v550, %v551
    %v554 = vrot.slane %v553, 4
    %vm555 = vcmp.lt.s32.totalorder %v553, %v554
    %v556 = vsel %vm555, %v553, %v554
    %v557 = vrot.slane %v556, 2
    %vm558 = vcmp.lt.s32.totalorder %v556, %v557
    %v559 = vsel %vm558, %v556, %v557
    %v560 = vrot.slane %v559, 1
    %vm561 = vcmp.lt.s32.totalorder %v559, %v560
    %v562 = vsel %vm561, %v559, %v560
    %v563 = vsel %vm232, %v525, 2147483647
    %v564 = vsel %vm232, %v526, 2147483647
    %vm565 = vcmp.lt.s32.totalorder %v563, %v564
    %v566 = vsel %vm565, %v563, %v564
    %v567 = vrot.slane %v566, 4
    %vm568 = vcmp.lt.s32.totalorder %v566, %v567
    %v569 = vsel %vm568, %v566, %v567
    %v570 = vrot.slane %v569, 2
    %vm571 = vcmp.lt.s32.totalorder %v569, %v570
    %v572 = vsel %vm571, %v569, %v570
    %v573 = vrot.slane %v572, 1
    %vm574 = vcmp.lt.s32.totalorder %v572, %v573
    %v575 = vsel %vm574, %v572, %v573
    %v576 = vsel %vm232, %v527, 2147483647
    %v577 = vsel %vm232, %v528, 2147483647
    %vm578 = vcmp.lt.s32.totalorder %v576, %v577
    %v579 = vsel %vm578, %v576, %v577
    %v580 = vrot.slane %v579, 4
    %vm581 = vcmp.lt.s32.totalorder %v579, %v580
    %v582 = vsel %vm581, %v579, %v580
    %v583 = vrot.slane %v582, 2
    %vm584 = vcmp.lt.s32.totalorder %v582, %v583
    %v585 = vsel %vm584, %v582, %v583
    %v586 = vrot.slane %v585, 1
    %vm587 = vcmp.lt.s32.totalorder %v585, %v586
    %v588 = vsel %vm587, %v585, %v586
    %v589 = vsel %vm232, %v529, 2147483647
    %v590 = vsel %vm232, %v530, 2147483647
    %vm591 = vcmp.lt.s32.totalorder %v589, %v590
    %v592 = vsel %vm591, %v589, %v590
    %v593 = vrot.slane %v592, 4
    %vm594 = vcmp.lt.s32.totalorder %v592, %v593
    %v595 = vsel %vm594, %v592, %v593
    %v596 = vrot.slane %v595, 2
    %vm597 = vcmp.lt.s32.totalorder %v595, %v596
    %v598 = vsel %vm597, %v595, %v596
    %v599 = vrot.slane %v598, 1
    %vm600 = vcmp.lt.s32.totalorder %v598, %v599
    %v601 = vsel %vm600, %v598, %v599
    %v602 = vsel %vm232, %v531, 2147483647
    %v603 = vsel %vm232, %v532, 2147483647
    %vm604 = vcmp.lt.s32.totalorder %v602, %v603
    %v605 = vsel %vm604, %v602, %v603
    %v606 = vrot.slane %v605, 4
    %vm607 = vcmp.lt.s32.totalorder %v605, %v606
    %v608 = vsel %vm607, %v605, %v606
    %v609 = vrot.slane %v608, 2
    %vm610 = vcmp.lt.s32.totalorder %v608, %v609
    %v611 = vsel %vm610, %v608, %v609
    %v612 = vrot.slane %v611, 1
    %vm613 = vcmp.lt.s32.totalorder %v611, %v612
    %v614 = vsel %vm613, %v611, %v612
    %v615 = vsel %vm232, %v533, 2147483647
    %v616 = vsel %vm232, %v534, 2147483647
    %vm617 = vcmp.lt.s32.totalorder %v615, %v616
    %v618 = vsel %vm617, %v615, %v616
    %v619 = vrot.slane %v618, 4
    %vm620 = vcmp.lt.s32.totalorder %v618, %v619
    %v621 = vsel %vm620, %v618, %v619
    %v622 = vrot.slane %v621, 2
    %vm623 = vcmp.lt.s32.totalorder %v621, %v622
    %v624 = vsel %vm623, %v621, %v622
    %v625 = vrot.slane %v624, 1
    %vm626 = vcmp.lt.s32.totalorder %v624, %v625
    %v627 = vsel %vm626, %v624, %v625
    %v628 = vsel %vm232, %v535, 2147483647
    %v629 = vsel %vm232, %v536, 2147483647
    %vm630 = vcmp.lt.s32.totalorder %v628, %v629
    %v631 = vsel %vm630, %v628, %v629
    %v632 = vrot.slane %v631, 4
    %vm633 = vcmp.lt.s32.totalorder %v631, %v632
    %v634 = vsel %vm633, %v631, %v632
    %v635 = vrot.slane %v634, 2
    %vm636 = vcmp.lt.s32.totalorder %v634, %v635
    %v637 = vsel %vm636, %v634, %v635
    %v638 = vrot.slane %v637, 1
    %vm639 = vcmp.lt.s32.totalorder %v637, %v638
    %v640 = vsel %vm639, %v637, %v638
    %vm641 = vcmp.eq.s32.totalorder %v166, %v549
    %vm642 = vcmp.eq.s32.totalorder %v167, %v549
    %vm643 = vcmp.eq.s32.totalorder %v166, %v562
    %vm644 = vcmp.eq.s32.totalorder %v167, %v562
    %vm645 = vcmp.eq.s32.totalorder %v166, %v575
    %vm646 = vcmp.eq.s32.totalorder %v167, %v575
    %vm647 = vcmp.eq.s32.totalorder %v166, %v588
    %vm648 = vcmp.eq.s32.totalorder %v167, %v588
    %vm649 = vcmp.eq.s32.totalorder %v166, %v601
    %vm650 = vcmp.eq.s32.totalorder %v167, %v601
    %vm651 = vcmp.eq.s32.totalorder %v166, %v614
    %vm652 = vcmp.eq.s32.totalorder %v167, %v614
    %vm653 = vcmp.eq.s32.totalorder %v166, %v627
    %vm654 = vcmp.eq.s32.totalorder %v167, %v627
    %vm655 = vcmp.eq.s32.totalorder %v166, %v640
    %vm656 = vcmp.eq.s32.totalorder %v167, %v640
    %v657 = vld [vmem:[%s3] sm:$0xff]
    %v658 = vld [vmem:[%s3 + $0x8] sm:$0xff]
    %v659 = vld [vmem:[%s3 + $0x10] sm:$0xff]
    %v660 = vld [vmem:[%s3 + $0x18] sm:$0xff]
    %v661 = vld [vmem:[%s3 + $0x20] sm:$0xff]
    %v662 = vld [vmem:[%s3 + $0x28] sm:$0xff]
    %v663 = vld [vmem:[%s3 + $0x30] sm:$0xff]
    %v664 = vld [vmem:[%s3 + $0x38] sm:$0xff]
    %v665 = vld [vmem:[%s3 + $0x40] sm:$0xff]
    %v666 = vld [vmem:[%s3 + $0x48] sm:$0xff]
    %v667 = vld [vmem:[%s3 + $0x50] sm:$0xff]
    %v668 = vld [vmem:[%s3 + $0x58] sm:$0xff]
    %v669 = vld [vmem:[%s3 + $0x60] sm:$0xff]
    %v670 = vld [vmem:[%s3 + $0x68] sm:$0xff]
    %v671 = vld [vmem:[%s3 + $0x70] sm:$0xff]
    %v672 = vld [vmem:[%s3 + $0x78] sm:$0xff]
    %v673 = vsel %vm641, 1, 0
    %v674 = vsel %vm642, 1, 0
    %v675 = vsel %vm643, 1, 0
    %v676 = vsel %vm644, 1, 0
    %v677 = vsel %vm645, 1, 0
    %v678 = vsel %vm646, 1, 0
    %v679 = vsel %vm647, 1, 0
    %v680 = vsel %vm648, 1, 0
    %v681 = vsel %vm649, 1, 0
    %v682 = vsel %vm650, 1, 0
    %v683 = vsel %vm651, 1, 0
    %v684 = vsel %vm652, 1, 0
    %v685 = vsel %vm653, 1, 0
    %v686 = vsel %vm654, 1, 0
    %v687 = vsel %vm655, 1, 0
    %v688 = vsel %vm656, 1, 0
    %689 = vset.pattern.permute.xlu0 0
    %690 = vperm.xlu0 %689, %v673
    %v691 = vpop.permute.xlu0 %690
    %692 = vset.pattern.permute.xlu0 0
    %693 = vperm.xlu0 %692, %v674
    %v694 = vpop.permute.xlu0 %693
    %695 = vset.pattern.permute.xlu0 0
    %696 = vperm.xlu0 %695, %v675
    %v697 = vpop.permute.xlu0 %696
    %698 = vset.pattern.permute.xlu0 0
    %699 = vperm.xlu0 %698, %v676
    %v700 = vpop.permute.xlu0 %699
    %701 = vset.pattern.permute.xlu0 0
    %702 = vperm.xlu0 %701, %v677
    %v703 = vpop.permute.xlu0 %702
    %704 = vset.pattern.permute.xlu0 0
    %705 = vperm.xlu0 %704, %v678
    %v706 = vpop.permute.xlu0 %705
    %707 = vset.pattern.permute.xlu0 0
    %708 = vperm.xlu0 %707, %v679
    %v709 = vpop.permute.xlu0 %708
    %710 = vset.pattern.permute.xlu0 0
    %711 = vperm.xlu0 %710, %v680
    %v712 = vpop.permute.xlu0 %711
    %713 = vset.pattern.permute.xlu0 0
    %714 = vperm.xlu0 %713, %v681
    %v715 = vpop.permute.xlu0 %714
    %716 = vset.pattern.permute.xlu0 0
    %717 = vperm.xlu0 %716, %v682
    %v718 = vpop.permute.xlu0 %717
    %719 = vset.pattern.permute.xlu0 0
    %720 = vperm.xlu0 %719, %v683
    %v721 = vpop.permute.xlu0 %720
    %722 = vset.pattern.permute.xlu0 0
    %723 = vperm.xlu0 %722, %v684
    %v724 = vpop.permute.xlu0 %723
    %725 = vset.pattern.permute.xlu0 0
    %726 = vperm.xlu0 %725, %v685
    %v727 = vpop.permute.xlu0 %726
    %728 = vset.pattern.permute.xlu0 0
    %729 = vperm.xlu0 %728, %v686
    %v730 = vpop.permute.xlu0 %729
    %731 = vset.pattern.permute.xlu0 0
    %732 = vperm.xlu0 %731, %v687
    %v733 = vpop.permute.xlu0 %732
    %734 = vset.pattern.permute.xlu0 0
    %735 = vperm.xlu0 %734, %v688
    %v736 = vpop.permute.xlu0 %735
    %vm737 = vcmp.eq.s32.totalorder %v691, 1
    %vm738 = vcmp.eq.s32.totalorder %v694, 1
    %vm739 = vcmp.eq.s32.totalorder %v697, 1
    %vm740 = vcmp.eq.s32.totalorder %v700, 1
    %vm741 = vcmp.eq.s32.totalorder %v703, 1
    %vm742 = vcmp.eq.s32.totalorder %v706, 1
    %vm743 = vcmp.eq.s32.totalorder %v709, 1
    %vm744 = vcmp.eq.s32.totalorder %v712, 1
    %vm745 = vcmp.eq.s32.totalorder %v715, 1
    %vm746 = vcmp.eq.s32.totalorder %v718, 1
    %vm747 = vcmp.eq.s32.totalorder %v721, 1
    %vm748 = vcmp.eq.s32.totalorder %v724, 1
    %vm749 = vcmp.eq.s32.totalorder %v727, 1
    %vm750 = vcmp.eq.s32.totalorder %v730, 1
    %vm751 = vcmp.eq.s32.totalorder %v733, 1
    %vm752 = vcmp.eq.s32.totalorder %v736, 1
    %v753 = vsel %vm737, %v657, 0.0
    %v754 = vsel %vm738, %v658, 0.0
    %v755 = vsel %vm739, %v659, 0.0
    %v756 = vsel %vm740, %v660, 0.0
    %v757 = vsel %vm741, %v661, 0.0
    %v758 = vsel %vm742, %v662, 0.0
    %v759 = vsel %vm743, %v663, 0.0
    %v760 = vsel %vm744, %v664, 0.0
    %v761 = vsel %vm745, %v665, 0.0
    %v762 = vsel %vm746, %v666, 0.0
    %v763 = vsel %vm747, %v667, 0.0
    %v764 = vsel %vm748, %v668, 0.0
    %v765 = vsel %vm749, %v669, 0.0
    %v766 = vsel %vm750, %v670, 0.0
    %v767 = vsel %vm751, %v671, 0.0
    %v768 = vsel %vm752, %v672, 0.0
    %vm769 = vcmask 64512
    %v770 = vsel %vm769, %v753, 0.0
    %v771 = vsel %vm769, %v754, 0.0
    %v772 = vadd.f32 %v770, %v771
    %v773 = vrot.slane %v772, 4
    %v774 = vadd.f32 %v772, %v773
    %v775 = vrot.slane %v774, 2
    %v776 = vadd.f32 %v774, %v775
    %v777 = vrot.slane %v776, 1
    %v778 = vadd.f32 %v776, %v777
    %v779 = vsel %vm769, %v755, 0.0
    %v780 = vsel %vm769, %v756, 0.0
    %v781 = vadd.f32 %v779, %v780
    %v782 = vrot.slane %v781, 4
    %v783 = vadd.f32 %v781, %v782
    %v784 = vrot.slane %v783, 2
    %v785 = vadd.f32 %v783, %v784
    %v786 = vrot.slane %v785, 1
    %v787 = vadd.f32 %v785, %v786
    %v788 = vsel %vm769, %v757, 0.0
    %v789 = vsel %vm769, %v758, 0.0
    %v790 = vadd.f32 %v788, %v789
    %v791 = vrot.slane %v790, 4
    %v792 = vadd.f32 %v790, %v791
    %v793 = vrot.slane %v792, 2
    %v794 = vadd.f32 %v792, %v793
    %v795 = vrot.slane %v794, 1
    %v796 = vadd.f32 %v794, %v795
    %v797 = vsel %vm769, %v759, 0.0
    %v798 = vsel %vm769, %v760, 0.0
    %v799 = vadd.f32 %v797, %v798
    %v800 = vrot.slane %v799, 4
    %v801 = vadd.f32 %v799, %v800
    %v802 = vrot.slane %v801, 2
    %v803 = vadd.f32 %v801, %v802
    %v804 = vrot.slane %v803, 1
    %v805 = vadd.f32 %v803, %v804
    %v806 = vsel %vm769, %v761, 0.0
    %v807 = vsel %vm769, %v762, 0.0
    %v808 = vadd.f32 %v806, %v807
    %v809 = vrot.slane %v808, 4
    %v810 = vadd.f32 %v808, %v809
    %v811 = vrot.slane %v810, 2
    %v812 = vadd.f32 %v810, %v811
    %v813 = vrot.slane %v812, 1
    %v814 = vadd.f32 %v812, %v813
    %v815 = vsel %vm769, %v763, 0.0
    %v816 = vsel %vm769, %v764, 0.0
    %v817 = vadd.f32 %v815, %v816
    %v818 = vrot.slane %v817, 4
    %v819 = vadd.f32 %v817, %v818
    %v820 = vrot.slane %v819, 2
    %v821 = vadd.f32 %v819, %v820
    %v822 = vrot.slane %v821, 1
    %v823 = vadd.f32 %v821, %v822
    %v824 = vsel %vm769, %v765, 0.0
    %v825 = vsel %vm769, %v766, 0.0
    %v826 = vadd.f32 %v824, %v825
    %v827 = vrot.slane %v826, 4
    %v828 = vadd.f32 %v826, %v827
    %v829 = vrot.slane %v828, 2
    %v830 = vadd.f32 %v828, %v829
    %v831 = vrot.slane %v830, 1
    %v832 = vadd.f32 %v830, %v831
    %v833 = vsel %vm769, %v767, 0.0
    %v834 = vsel %vm769, %v768, 0.0
    %v835 = vadd.f32 %v833, %v834
    %v836 = vrot.slane %v835, 4
    %v837 = vadd.f32 %v835, %v836
    %v838 = vrot.slane %v837, 2
    %v839 = vadd.f32 %v837, %v838
    %v840 = vrot.slane %v839, 1
    %v841 = vadd.f32 %v839, %v840
    %vm842 = vcmask 57344
    %843 = vst.msk [vmem:[#allocation2] sm:$0x1] %vm842, %v778
    %844 = vst.msk [vmem:[#allocation2 + $0x1] sm:$0x1] %vm842, %v787
    %845 = vst.msk [vmem:[#allocation2 + $0x2] sm:$0x1] %vm842, %v796
    %846 = vst.msk [vmem:[#allocation2 + $0x3] sm:$0x1] %vm842, %v805
    %847 = vst.msk [vmem:[#allocation2 + $0x4] sm:$0x1] %vm842, %v814
    %848 = vst.msk [vmem:[#allocation2 + $0x5] sm:$0x1] %vm842, %v823
    %849 = vst.msk [vmem:[#allocation2 + $0x6] sm:$0x1] %vm842, %v832
    %850 = vst.msk [vmem:[#allocation2 + $0x7] sm:$0x1] %vm842, %v841
    // Predicated region
    $region18: #{tpu_custom_call.1} parent=1 // pred_check
      _
    $region19: #{tpu_custom_call.1} parent=1 // pred_check_branch
      %852 = sbr.rel (0) target = $region21
    $region20: #{tpu_custom_call.1} parent=1 // pred_region
      %s854 = ssub.s32 128, 128
      %855 = vsyncadd [#allocation3], %s854
      %s856 = sshll.u32 [#allocation2], 4
      %s857 = int_to_ptr.vmem [resolvable:$true] %s856
      %862 = dma.vmem_to_hbm [thread:$0]  %s857, 128, %s4, [#allocation3], 16, 16, 1
    $region21: #{tpu_custom_call.1} parent=1 // pred_fallthru
      _
    // Predicated region
    $region22: #{tpu_custom_call.1} parent=1 // pred_check
      _
    $region23: #{tpu_custom_call.1} parent=1 // pred_check_branch
      %864 = sbr.rel (0) target = $region25
    $region24: #{tpu_custom_call.1} parent=1 // pred_region
      _
    $region25: #{tpu_custom_call.1} parent=1 // pred_fallthru
      _
    // Predicated region
    $region26: #{tpu_custom_call.1} parent=1 // pred_check
      _
    $region27: #{tpu_custom_call.1} parent=1 // pred_check_branch
      %866 = sbr.rel (0) target = $region29
    $region28: #{tpu_custom_call.1} parent=1 // pred_region
      %867 = dma.done [#allocation3], 128
    $region29: #{tpu_custom_call.1} parent=1 // pred_fallthru
      _
    // Predicated region
    $region30: #{tpu_custom_call.1} parent=1 // pred_check
      _
    $region31: #{tpu_custom_call.1} parent=1 // pred_check_branch
      %869 = sbr.rel (0) target = $region33
    $region32: #{tpu_custom_call.1} parent=1 // pred_region
      _
    $region33: #{tpu_custom_call.1} parent=1 // pred_fallthru
      _
    %870 = vsyncpa [#allocation3], 1

</llo_original>
